<compile_context>
chip_gen: v7x
topology: tpu7x:2x2x1
jax: 0.10.0
libtpu: 0.0.40
codegen_flags: <defaults>
</compile_context>

<pallas_src>
import numpy as np
import jax
import jax.numpy as jnp
from jax.experimental import pallas as pl
from jax.experimental.pallas import tpu as pltpu


# ------------------------------ Pallas kernel -------------------------------

def _make_channel_gate_kernel(bt):
    """Kernel specialised for a static per-block batch size `bt`."""

    def kernel(x_ref, w1_ref, b1_ref, w2_ref, b2_ref, o_ref):
        # x_ref block: (bt, C, HW) f32; channels on sublanes, spatial on lanes.
        hw = x_ref.shape[2]
        inv_hw = 1.0 / hw

        # ---- phase 1: per-element global pools -> pooled matrix (C, 2*bt) ----
        # Static Python loop (bt is a small compile-time int): each iteration touches
        # one (C, HW) slab and only its tiny (C, 1) reductions survive the iteration.
        avg_cols = []
        max_cols = []
        for b in range(bt):
            xv = x_ref[b]                                            # (C, HW)
            avg_cols.append(jnp.sum(xv, axis=1, keepdims=True) * inv_hw)
            max_cols.append(jnp.max(xv, axis=1, keepdims=True))
        # Column layout: [avg_0 .. avg_{bt-1} | max_0 .. max_{bt-1}]
        p = jnp.concatenate(avg_cols + max_cols, axis=1)             # (C, 2*bt)

        # ---- phase 2: shared MLP batched over all 2*bt pooled vectors (MXU) ----
        # PyTorch Linear weights used unmodified: w1 (Ch, C), w2 (C, Ch).
        h = jnp.dot(w1_ref[...], p, preferred_element_type=jnp.float32) + b1_ref[...]
        h = jnp.maximum(h, 0.0)                                      # (Ch, 2*bt)
        y = jnp.dot(w2_ref[...], h, preferred_element_type=jnp.float32) + b2_ref[...]
        att = y[:, :bt] + y[:, bt:2 * bt]                            # (C, bt) = mlp(avg)+mlp(max)
        gate = 1.0 / (1.0 + jnp.exp(-att))                           # sigmoid (exp on EUP)

        # ---- phase 3: per-channel scaling of the feature map ------------------
        for b in range(bt):
            o_ref[b] = x_ref[b] * gate[:, b:b + 1]                   # lane-broadcast scale

    return kernel


# -------------------------------- wrapper -----------------------------------

def channel_gate_forward(x, params, *, block_batch=None):
    """x: (N, C, H, W) f32.  params: w1 (Ch,C), b1 (Ch,), w2 (C,Ch), b2 (C,)."""
    n, c, h, w = x.shape
    hw = h * w
    ch = params["w1"].shape[0]
    per_elem_bytes = c * hw * x.dtype.itemsize

    # --- choose Bt: big enough to amortize per-grid-step overhead (~1 MiB input
    # blocks), small enough to fit every generation's VMEM, and keep >= 2 grid
    # steps when possible so the "parallel" axis can use both v7x TensorCores.
    if block_batch is None:
        target_bytes = 1 << 20
        bt = max(1, min(n, target_bytes // per_elem_bytes))
        if bt >= n and n >= 2:
            bt = (n + 1) // 2
        vmem_block_cap = 8 << 20                       # double-buffered in+out stays far under 64 MiB
        bt = max(1, min(bt, vmem_block_cap // per_elem_bytes))
    else:
        bt = max(1, min(int(block_batch), n))
    bt = int(bt)

    n_blocks = pl.cdiv(n, bt)
    n_pad = n_blocks * bt

    x2 = x.reshape(n, c, hw)                           # contiguous (free) reshape
    if n_pad != n:
        # Zero-pad the batch; padded elements are computed but sliced away below.
        x2 = jnp.pad(x2, ((0, n_pad - n), (0, 0), (0, 0)))

    b1c = params["b1"].reshape(ch, 1)
    b2c = params["b2"].reshape(c, 1)

    block_bytes = bt * per_elem_bytes
    weight_bytes = (params["w1"].size + params["w2"].size + ch + c) * 4
    # 2x double-buffered input + 2x output + weights, with margin; capped under v7x VMEM.
    vmem_limit = int(min(48 << 20,
                         max(16 << 20, 4 * block_bytes + weight_bytes + (2 << 20))))

    out = pl.pallas_call(
        _make_channel_gate_kernel(bt),
        out_shape=jax.ShapeDtypeStruct((n_pad, c, hw), x.dtype),
        grid=(n_blocks,),
        in_specs=[
            pl.BlockSpec((bt, c, hw), lambda i: (i, 0, 0)),   # x: Bt batch elements
            pl.BlockSpec((ch, c), lambda i: (0, 0)),          # w1 (full extent)
            pl.BlockSpec((ch, 1), lambda i: (0, 0)),          # b1 as column
            pl.BlockSpec((c, ch), lambda i: (0, 0)),          # w2
            pl.BlockSpec((c, 1), lambda i: (0, 0)),           # b2 as column
        ],
        out_specs=pl.BlockSpec((bt, c, hw), lambda i: (i, 0, 0)),
        compiler_params=pltpu.CompilerParams(
            dimension_semantics=("parallel",),
            vmem_limit_bytes=vmem_limit),
    )(x2, params["w1"], b1c, params["w2"], b2c)

    if n_pad != n:
        out = out[:n]
    return out.reshape(n, c, h, w)


# --------------------------- pure-JAX reference -----------------------------

def _reference_forward(x, params):
    avg = x.mean(axis=(2, 3))                                  # F.avg_pool2d + Flatten
    mx = x.max(axis=(2, 3))                                    # F.max_pool2d + Flatten

    def mlp(p):
        hdn = jnp.maximum(p @ params["w1"].T + params["b1"], 0.0)
        return hdn @ params["w2"].T + params["b2"]

    att = mlp(avg) + mlp(mx)
    gate = jax.nn.sigmoid(att)[:, :, None, None]
    return x * gate


# ----------------------------------- main -----------------------------------

if __name__ == "__main__":
    key = jax.random.PRNGKey(0)
    kx, kx2, k1, k2, k3, k4 = jax.random.split(key, 6)

    gate_channels = 32          # must be >= reduction_ratio for a non-empty hidden layer
    reduction_ratio = 16
    hidden = gate_channels // reduction_ratio                  # 2
    H, W = 16, 16

    params = {
        "w1": 0.3 * jax.random.normal(k1, (hidden, gate_channels), jnp.float32),
        "b1": 0.1 * jax.random.normal(k2, (hidden,), jnp.float32),
        "w2": 0.3 * jax.random.normal(k3, (gate_channels, hidden), jnp.float32),
        "b2": 0.1 * jax.random.normal(k4, (gate_channels,), jnp.float32),
    }

    ref_fn = jax.jit(lambda xx: _reference_forward(xx, params))

    # Case 1: small batch (Bt=1 per block, 2 grid steps).
    x_small = jax.random.normal(kx, (2, gate_channels, H, W), jnp.float32)
    out_small = jax.block_until_ready(
        jax.jit(lambda xx: channel_gate_forward(xx, params))(x_small))
    np.testing.assert_allclose(np.asarray(out_small), np.asarray(ref_fn(x_small)),
                               rtol=2e-4, atol=2e-5)

    # Case 2: batch not divisible by the block size -> exercises Bt>1 (batched MLP),
    # multi-element blocks, and the padding path.
    x_big = jax.random.normal(kx2, (5, gate_channels, H, W), jnp.float32)
    out_big = jax.block_until_ready(
        jax.jit(lambda xx: channel_gate_forward(xx, params))(x_big))
    np.testing.assert_allclose(np.asarray(out_big), np.asarray(ref_fn(x_big)),
                               rtol=2e-4, atol=2e-5)

    assert out_small.shape == x_small.shape and out_big.shape == x_big.shape
    print("KERNEL_OK")
</pallas_src>

<mosaic_0001>
module attributes {stable_mosaic.version = 11 : i64} {
  func.func @kernel(%arg0: i32, %arg1: memref<1x32x256xf32, #tpu.memory_space<vmem>>, %arg2: memref<2x32xf32, #tpu.memory_space<vmem>>, %arg3: memref<2x1xf32, #tpu.memory_space<vmem>>, %arg4: memref<32x2xf32, #tpu.memory_space<vmem>>, %arg5: memref<32x1xf32, #tpu.memory_space<vmem>>, %arg6: memref<1x32x256xf32, #tpu.memory_space<vmem>>) attributes {dimension_semantics = [#tpu.dimension_semantics<parallel>], iteration_bounds = array<i64: 2>, scalar_prefetch = 0 : i64, scratch_operands = 0 : i64, tpu.core_type = #tpu.core_type<tc>, window_params = [{transform_indices = @transform_0, window_bounds = array<i64: 1, 32, 256>}, {pipeline_mode = #tpu.pipeline_mode<synchronous>, transform_indices = @transform_1, window_bounds = array<i64: 2, 32>}, {pipeline_mode = #tpu.pipeline_mode<synchronous>, transform_indices = @transform_2, window_bounds = array<i64: 2, 1>}, {pipeline_mode = #tpu.pipeline_mode<synchronous>, transform_indices = @transform_3, window_bounds = array<i64: 32, 2>}, {pipeline_mode = #tpu.pipeline_mode<synchronous>, transform_indices = @transform_4, window_bounds = array<i64: 32, 1>}, {transform_indices = @transform_5, window_bounds = array<i64: 1, 32, 256>}]} {
    %c0 = arith.constant 0 : index
    %c0_0 = arith.constant 0 : index
    %c0_1 = arith.constant 0 : index
    %0 = vector.load %arg1[%c0, %c0_0, %c0_1] : memref<1x32x256xf32, #tpu.memory_space<vmem>>, vector<1x32x256xf32>
    %1 = vector.shape_cast %0 : vector<1x32x256xf32> to vector<32x256xf32>
    %cst = arith.constant dense<0.000000e+00> : vector<32xf32>
    %2 = vector.multi_reduction <add>, %1, %cst [1] : vector<32x256xf32> to vector<32xf32>
    %3 = vector.shape_cast %2 : vector<32xf32> to vector<32x1xf32>
    %cst_2 = arith.constant 3.906250e-03 : f32
    %4 = vector.broadcast %cst_2 : f32 to vector<32x1xf32>
    %5 = arith.mulf %3, %4 : vector<32x1xf32>
    %cst_3 = arith.constant dense<0xFF800000> : vector<32xf32>
    %6 = vector.multi_reduction <maximumf>, %1, %cst_3 [1] : vector<32x256xf32> to vector<32xf32>
    %7 = vector.shape_cast %6 : vector<32xf32> to vector<32x1xf32>
    %8 = tpu.concatenate %5, %7 in 1 : vector<32x1xf32>, vector<32x1xf32> -> vector<32x2xf32>
    %c0_4 = arith.constant 0 : index
    %c0_5 = arith.constant 0 : index
    %9 = vector.load %arg2[%c0_4, %c0_5] : memref<2x32xf32, #tpu.memory_space<vmem>>, vector<2x32xf32>
    %cst_6 = arith.constant dense<0.000000e+00> : vector<2x2xf32>
    %10 = tpu.matmul %9, %8, %cst_6 {dimension_numbers = #tpu.dot_dimension_numbers<[1], [0], [0], [1], [0, 0, 1, 1], [], []>} : vector<2x32xf32>, vector<32x2xf32>, vector<2x2xf32> -> vector<2x2xf32>
    %c0_7 = arith.constant 0 : index
    %c0_8 = arith.constant 0 : index
    %11 = vector.load %arg3[%c0_7, %c0_8] : memref<2x1xf32, #tpu.memory_space<vmem>>, vector<2x1xf32>
    %12 = vector.broadcast %11 : vector<2x1xf32> to vector<2x2xf32>
    %13 = arith.addf %10, %12 : vector<2x2xf32>
    %cst_9 = arith.constant 0.000000e+00 : f32
    %14 = vector.broadcast %cst_9 : f32 to vector<2x2xf32>
    %15 = arith.maximumf %13, %14 : vector<2x2xf32>
    %c0_10 = arith.constant 0 : index
    %c0_11 = arith.constant 0 : index
    %16 = vector.load %arg4[%c0_10, %c0_11] : memref<32x2xf32, #tpu.memory_space<vmem>>, vector<32x2xf32>
    %cst_12 = arith.constant dense<0.000000e+00> : vector<32x2xf32>
    %17 = tpu.matmul %16, %15, %cst_12 {dimension_numbers = #tpu.dot_dimension_numbers<[1], [0], [0], [1], [0, 0, 1, 1], [], []>} : vector<32x2xf32>, vector<2x2xf32>, vector<32x2xf32> -> vector<32x2xf32>
    %c0_13 = arith.constant 0 : index
    %c0_14 = arith.constant 0 : index
    %18 = vector.load %arg5[%c0_13, %c0_14] : memref<32x1xf32, #tpu.memory_space<vmem>>, vector<32x1xf32>
    %19 = vector.broadcast %18 : vector<32x1xf32> to vector<32x2xf32>
    %20 = arith.addf %17, %19 : vector<32x2xf32>
    %21 = vector.extract_strided_slice %20 {offsets = [0, 0], sizes = [32, 1], strides = [1, 1]} : vector<32x2xf32> to vector<32x1xf32>
    %22 = vector.extract_strided_slice %20 {offsets = [0, 1], sizes = [32, 1], strides = [1, 1]} : vector<32x2xf32> to vector<32x1xf32>
    %23 = arith.addf %21, %22 : vector<32x1xf32>
    %cst_15 = arith.constant 0.000000e+00 : f32
    %24 = vector.broadcast %cst_15 : f32 to vector<32x1xf32>
    %25 = arith.subf %24, %23 : vector<32x1xf32>
    %26 = math.exp %25 : vector<32x1xf32>
    %cst_16 = arith.constant 1.000000e+00 : f32
    %27 = vector.broadcast %cst_16 : f32 to vector<32x1xf32>
    %28 = arith.addf %27, %26 : vector<32x1xf32>
    %cst_17 = arith.constant 1.000000e+00 : f32
    %29 = vector.broadcast %cst_17 : f32 to vector<32x1xf32>
    %30 = arith.divf %29, %28 : vector<32x1xf32>
    %c0_18 = arith.constant 0 : index
    %c0_19 = arith.constant 0 : index
    %c0_20 = arith.constant 0 : index
    %31 = vector.load %arg1[%c0_18, %c0_19, %c0_20] : memref<1x32x256xf32, #tpu.memory_space<vmem>>, vector<1x32x256xf32>
    %32 = vector.shape_cast %31 : vector<1x32x256xf32> to vector<32x256xf32>
    %33 = vector.broadcast %30 : vector<32x1xf32> to vector<32x256xf32>
    %34 = arith.mulf %32, %33 : vector<32x256xf32>
    %c0_21 = arith.constant 0 : index
    %c0_22 = arith.constant 0 : index
    %c0_23 = arith.constant 0 : index
    %35 = vector.load %arg6[%c0_21, %c0_22, %c0_23] : memref<1x32x256xf32, #tpu.memory_space<vmem>>, vector<1x32x256xf32>
    %36 = vector.shape_cast %35 : vector<1x32x256xf32> to vector<32x256xf32>
    %37 = vector.shape_cast %34 : vector<32x256xf32> to vector<1x32x256xf32>
    tpu.vector_store %arg6[%c0_21, %c0_22, %c0_23], %37 {strides = array<i32>} : memref<1x32x256xf32, #tpu.memory_space<vmem>>, vector<1x32x256xf32>,
    return
  }
  func.func @transform_0(%arg0: i32) -> (i32, i32, i32) {
    %c0_i32 = arith.constant 0 : i32
    %c0_i32_0 = arith.constant 0 : i32
    %c0_i32_1 = arith.constant 0 : i32
    return %arg0, %c0_i32, %c0_i32_0 : i32, i32, i32
  }
  func.func @transform_1(%arg0: i32) -> (i32, i32) {
    %c0_i32 = arith.constant 0 : i32
    %c0_i32_0 = arith.constant 0 : i32
    %c0_i32_1 = arith.constant 0 : i32
    return %c0_i32, %c0_i32_0 : i32, i32
  }
  func.func @transform_2(%arg0: i32) -> (i32, i32) {
    %c0_i32 = arith.constant 0 : i32
    %c0_i32_0 = arith.constant 0 : i32
    %c0_i32_1 = arith.constant 0 : i32
    return %c0_i32, %c0_i32_0 : i32, i32
  }
  func.func @transform_3(%arg0: i32) -> (i32, i32) {
    %c0_i32 = arith.constant 0 : i32
    %c0_i32_0 = arith.constant 0 : i32
    %c0_i32_1 = arith.constant 0 : i32
    return %c0_i32, %c0_i32_0 : i32, i32
  }
  func.func @transform_4(%arg0: i32) -> (i32, i32) {
    %c0_i32 = arith.constant 0 : i32
    %c0_i32_0 = arith.constant 0 : i32
    %c0_i32_1 = arith.constant 0 : i32
    return %c0_i32, %c0_i32_0 : i32, i32
  }
  func.func @transform_5(%arg0: i32) -> (i32, i32, i32) {
    %c0_i32 = arith.constant 0 : i32
    %c0_i32_0 = arith.constant 0 : i32
    %c0_i32_1 = arith.constant 0 : i32
    return %arg0, %c0_i32, %c0_i32_0 : i32, i32, i32
  }
}

</mosaic_0001>

<llo_original>
// kernel: _lambda_.1
$region0: #{_lambda_.1}
  #allocation0 [shape = 'u32[]', space=smem, size = 0x4, offset = 0x4, fixed_abs, tag = 'smem constant byte address 0x4 - core index']
  #allocation1 [shape = 'u32[144,128]{1,0:T(1,128)}', space=vmem, size = 0x12000, scoped, tag = 'internal scratch']
  %s0 = inlined_call_operand.vmem [shape: f32[2,32,256], index: 0, kind: input, shape index: {}]
  %s1 = inlined_call_operand.vmem [shape: f32[2,32], index: 1, kind: input, shape index: {}]
  %s2 = inlined_call_operand.vmem [shape: f32[2,1], index: 2, kind: input, shape index: {}]
  %s3 = inlined_call_operand.vmem [shape: f32[32,2], index: 3, kind: input, shape index: {}]
  %s4 = inlined_call_operand.vmem [shape: f32[32,1], index: 4, kind: input, shape index: {}]
  %s5 = inlined_call_operand.vmem [shape: f32[2,32,256], index: 5, kind: output, shape index: {}]
  %s6 = sld [smem:[#allocation0]]
  $region53: #{_lambda_.1} parent=0
    _
  %s8 = ssub.s32 1, %s6
  %s9 = scalar_select 0, %s8, %s6
  loop: start=0, step=1, limit=4
  $region2: #{_lambda_.1} parent=0 // loop_pre_header
    _
  $region3: #{_lambda_.1} parent=0 // loop_header
    %s11 = sphi 0, %s15
    %p12 = scmp.ge.s32.totalorder %s11, 4
    %s21 = sphi 0, %s23
    %s24 = sphi 0, %s21
    %s25 = sphi 0, %s24
    %s41 = sphi 0, %s25
    %s45 = sphi 0, %s45
    %s47 = sphi 0, %s45
    %s48 = sphi 0, %s47
    %s62 = sphi 0, %s48
    %s66 = sphi 0, %s66
    %s68 = sphi 0, %s66
    %s69 = sphi 0, %s68
    %s83 = sphi 0, %s69
    %s87 = sphi 0, %s87
    %s89 = sphi 0, %s87
    %s90 = sphi 0, %s89
    %s104 = sphi 0, %s90
    %s108 = sphi 0, %s108
    %s110 = sphi 0, %s108
    %s111 = sphi 0, %s110
    %s125 = sphi 0, %s111
    %s131 = sphi 0, %s133
    %s134 = sphi 0, %s131
    %s135 = sphi 0, %s134
    %s151 = sphi 0, %s135
  $region4: #{_lambda_.1} parent=0 // loop_header_branch
    %14 = sbr.rel (%p12) target = $region8
  $region5: #{_lambda_.1} parent=0 // loop_body
    %s16 = ssub.s32 %s11, 1
    %s17 = ssub.s32 %s11, 2
    %s18 = sadd.s32 %s11, 1
    %s19 = ssub.s32 %s11, %s18
    %p20 = scmp.eq.s32.totalorder %s19, 0
    %s22 = sadd.s32 %s21, 1
    %s23 = scalar_select %p20, %s21, %s22
    %p26 = pneg %p20
    %p27 = scmp.eq.s32.totalorder %s11, 1
    %p28 = por %p26, %p27
    %p29 = scmp.ne.s32.totalorder %s21, %s24
    %p30 = scmp.eq.s32.totalorder %s11, 0
    %p31 = por %p29, %p30
    %p32 = scmp.ne.s32.totalorder %s21, %s24
    %p33 = scmp.eq.s32.totalorder %s16, 1
    %p34 = por %p32, %p33
    %p35 = scmp.ne.s32.totalorder %s24, %s25
    %p36 = scmp.eq.s32.totalorder %s16, 0
    %p37 = por %p35, %p36
    %p38 = scmp.ne.s32.totalorder %s24, %s25
    %p39 = scmp.eq.s32.totalorder %s17, 1
    %p40 = por %p38, %p39
    %p42 = scmp.ne.s32.totalorder %s25, %s41
    %p43 = scmp.eq.s32.totalorder %s17, 0
    %p44 = por %p42, %p43
    %s46 = sadd.s32 %s45, 1
    %p49 = scmp.eq.s32.totalorder %s11, 1
    %p50 = scmp.ne.s32.totalorder %s45, %s47
    %p51 = scmp.eq.s32.totalorder %s11, 0
    %p52 = por %p50, %p51
    %p53 = scmp.ne.s32.totalorder %s45, %s47
    %p54 = scmp.eq.s32.totalorder %s16, 1
    %p55 = por %p53, %p54
    %p56 = scmp.ne.s32.totalorder %s47, %s48
    %p57 = scmp.eq.s32.totalorder %s16, 0
    %p58 = por %p56, %p57
    %p59 = scmp.ne.s32.totalorder %s47, %s48
    %p60 = scmp.eq.s32.totalorder %s17, 1
    %p61 = por %p59, %p60
    %p63 = scmp.ne.s32.totalorder %s48, %s62
    %p64 = scmp.eq.s32.totalorder %s17, 0
    %p65 = por %p63, %p64
    %s67 = sadd.s32 %s66, 1
    %p70 = scmp.eq.s32.totalorder %s11, 1
    %p71 = scmp.ne.s32.totalorder %s66, %s68
    %p72 = scmp.eq.s32.totalorder %s11, 0
    %p73 = por %p71, %p72
    %p74 = scmp.ne.s32.totalorder %s66, %s68
    %p75 = scmp.eq.s32.totalorder %s16, 1
    %p76 = por %p74, %p75
    %p77 = scmp.ne.s32.totalorder %s68, %s69
    %p78 = scmp.eq.s32.totalorder %s16, 0
    %p79 = por %p77, %p78
    %p80 = scmp.ne.s32.totalorder %s68, %s69
    %p81 = scmp.eq.s32.totalorder %s17, 1
    %p82 = por %p80, %p81
    %p84 = scmp.ne.s32.totalorder %s69, %s83
    %p85 = scmp.eq.s32.totalorder %s17, 0
    %p86 = por %p84, %p85
    %s88 = sadd.s32 %s87, 1
    %p91 = scmp.eq.s32.totalorder %s11, 1
    %p92 = scmp.ne.s32.totalorder %s87, %s89
    %p93 = scmp.eq.s32.totalorder %s11, 0
    %p94 = por %p92, %p93
    %p95 = scmp.ne.s32.totalorder %s87, %s89
    %p96 = scmp.eq.s32.totalorder %s16, 1
    %p97 = por %p95, %p96
    %p98 = scmp.ne.s32.totalorder %s89, %s90
    %p99 = scmp.eq.s32.totalorder %s16, 0
    %p100 = por %p98, %p99
    %p101 = scmp.ne.s32.totalorder %s89, %s90
    %p102 = scmp.eq.s32.totalorder %s17, 1
    %p103 = por %p101, %p102
    %p105 = scmp.ne.s32.totalorder %s90, %s104
    %p106 = scmp.eq.s32.totalorder %s17, 0
    %p107 = por %p105, %p106
    %s109 = sadd.s32 %s108, 1
    %p112 = scmp.eq.s32.totalorder %s11, 1
    %p113 = scmp.ne.s32.totalorder %s108, %s110
    %p114 = scmp.eq.s32.totalorder %s11, 0
    %p115 = por %p113, %p114
    %p116 = scmp.ne.s32.totalorder %s108, %s110
    %p117 = scmp.eq.s32.totalorder %s16, 1
    %p118 = por %p116, %p117
    %p119 = scmp.ne.s32.totalorder %s110, %s111
    %p120 = scmp.eq.s32.totalorder %s16, 0
    %p121 = por %p119, %p120
    %p122 = scmp.ne.s32.totalorder %s110, %s111
    %p123 = scmp.eq.s32.totalorder %s17, 1
    %p124 = por %p122, %p123
    %p126 = scmp.ne.s32.totalorder %s111, %s125
    %p127 = scmp.eq.s32.totalorder %s17, 0
    %p128 = por %p126, %p127
    %s129 = ssub.s32 %s11, %s18
    %p130 = scmp.eq.s32.totalorder %s129, 0
    %s132 = sadd.s32 %s131, 1
    %s133 = scalar_select %p130, %s131, %s132
    %p136 = pneg %p130
    %p137 = scmp.eq.s32.totalorder %s11, 1
    %p138 = por %p136, %p137
    %p139 = scmp.ne.s32.totalorder %s131, %s134
    %p140 = scmp.eq.s32.totalorder %s11, 0
    %p141 = por %p139, %p140
    %p142 = scmp.ne.s32.totalorder %s131, %s134
    %p143 = scmp.eq.s32.totalorder %s16, 1
    %p144 = por %p142, %p143
    %p145 = scmp.ne.s32.totalorder %s134, %s135
    %p146 = scmp.eq.s32.totalorder %s16, 0
    %p147 = por %p145, %p146
    %p148 = scmp.ne.s32.totalorder %s134, %s135
    %p149 = scmp.eq.s32.totalorder %s17, 1
    %p150 = por %p148, %p149
    %p152 = scmp.ne.s32.totalorder %s135, %s151
    %p153 = scmp.eq.s32.totalorder %s17, 0
    %p154 = por %p152, %p153
    %p155 = scmp.le.s32.totalorder 1, %s11
    %p156 = scmp.lt.s32.totalorder %s11, 3
    %p157 = pnand %p155, %p156
    %p158 = pneg %p157
    // Predicated region
    $region9: #{_lambda_.1} parent=5 // pred_check
      _
    $region10: #{_lambda_.1} parent=5 // pred_check_branch
      %160 = sbr.rel (%p157) target = $region12
    $region11: #{_lambda_.1} parent=5 // pred_region
      %s161 = ssub.s32 %s11, 1
      // Predicated region
      $region13: #{_lambda_.1} parent=11 // pred_check
        %p162 = pneg %p58
      $region14: #{_lambda_.1} parent=11 // pred_check_branch
        %164 = sbr.rel (%p162) target = $region16
      $region15: #{_lambda_.1} parent=11 // pred_region
        _
      $region16: #{_lambda_.1} parent=11 // pred_fallthru
        _
      // Predicated region
      $region17: #{_lambda_.1} parent=11 // pred_check
        %p165 = pneg %p79
      $region18: #{_lambda_.1} parent=11 // pred_check_branch
        %167 = sbr.rel (%p165) target = $region20
      $region19: #{_lambda_.1} parent=11 // pred_region
        _
      $region20: #{_lambda_.1} parent=11 // pred_fallthru
        _
      // Predicated region
      $region21: #{_lambda_.1} parent=11 // pred_check
        %p168 = pneg %p100
      $region22: #{_lambda_.1} parent=11 // pred_check_branch
        %170 = sbr.rel (%p168) target = $region24
      $region23: #{_lambda_.1} parent=11 // pred_region
        _
      $region24: #{_lambda_.1} parent=11 // pred_fallthru
        _
      // Predicated region
      $region25: #{_lambda_.1} parent=11 // pred_check
        %p171 = pneg %p121
      $region26: #{_lambda_.1} parent=11 // pred_check_branch
        %173 = sbr.rel (%p171) target = $region28
      $region27: #{_lambda_.1} parent=11 // pred_region
        _
      $region28: #{_lambda_.1} parent=11 // pred_fallthru
        _
    $region12: #{_lambda_.1} parent=5 // pred_fallthru
      _
    %p174 = scmp.lt.s32.totalorder %s11, 2
    // Predicated region
    $region29: #{_lambda_.1} parent=5 // pred_check
      %p175 = pneg %p174
    $region30: #{_lambda_.1} parent=5 // pred_check_branch
      %177 = sbr.rel (%p175) target = $region32
    $region31: #{_lambda_.1} parent=5 // pred_region
      // Predicated region
      $region33: #{_lambda_.1} parent=31 // pred_check
        %p178 = pneg %p31
      $region34: #{_lambda_.1} parent=31 // pred_check_branch
        %180 = sbr.rel (%p178) target = $region36
      $region35: #{_lambda_.1} parent=31 // pred_region
        %p181 = scmp.lt.s32.totalorder %s11, 1
        %s182 = scalar_select %p181, %s11, 1
        %s183 = smul.addr %s182, 8
        %s184 = smul.addr %s183, 8
        %s185 = scalar_lea.vmem %s0, %s184
      $region36: #{_lambda_.1} parent=31 // pred_fallthru
        _
    $region32: #{_lambda_.1} parent=5 // pred_fallthru
      _
    %p186 = scmp.le.s32.totalorder 1, %s11
    %p187 = scmp.lt.s32.totalorder %s11, 3
    %p188 = pnand %p186, %p187
    %p189 = pneg %p188
    // Predicated region
    $region37: #{_lambda_.1} parent=5 // pred_check
      _
    $region38: #{_lambda_.1} parent=5 // pred_check_branch
      %191 = sbr.rel (%p188) target = $region40
    $region39: #{_lambda_.1} parent=5 // pred_region
      %s192 = ssub.s32 %s11, 1
      %p193 = scmp.lt.s32.totalorder %s16, 1
      %s194 = scalar_select %p193, %s16, 1
      %s195 = smul.addr %s194, 8
      %s196 = smul.addr %s195, 8
      %s197 = scalar_lea.vmem %s0, %s196
      %p198 = pneg %p37
      %p199 = pneg %p34
      %p200 = pneg %p58
      %p201 = pneg %p55
      %p202 = pneg %p79
      %p203 = pneg %p76
      %p204 = pneg %p100
      %p205 = pneg %p97
      %p206 = pneg %p121
      %p207 = pneg %p118
      %p208 = pneg %p147
      %p209 = pneg %p144
      %p210 = scmp.lt.s32.totalorder %s16, 1
      %s211 = scalar_select %p210, %s16, 1
      %s212 = smul.addr %s211, 8
      %s213 = smul.addr %s212, 8
      %s214 = scalar_lea.vmem %s5, %s213
      %p215 = scmp.lt.s32.totalorder %s16, 1
      %s216 = scalar_select %p215, %s16, 1
      %s217 = smul.addr %s216, 8
      %s218 = smul.addr %s217, 8
      %s219 = scalar_lea.vmem %s0, %s218
      %p220 = scmp.lt.s32.totalorder %s16, 1
      %s221 = scalar_select %p220, %s16, 1
      %s222 = smul.addr %s221, 8
      %s223 = smul.addr %s222, 8
      %s224 = scalar_lea.vmem %s5, %s223
      %v225 = vld [vmem:[%s219] sm:$0xff]
      %v226 = vld [vmem:[%s219 + $0x8] sm:$0xff]
      %v227 = vld [vmem:[%s219 + $0x10] sm:$0xff]
      %v228 = vld [vmem:[%s219 + $0x18] sm:$0xff]
      %v229 = vld [vmem:[%s219 + $0x20] sm:$0xff]
      %v230 = vld [vmem:[%s219 + $0x28] sm:$0xff]
      %v231 = vld [vmem:[%s219 + $0x30] sm:$0xff]
      %v232 = vld [vmem:[%s219 + $0x38] sm:$0xff]
      %v233 = vadd.f32 %v225, %v226
      %234 = vadd.xlane.f32.xlu0 %v233
      %v235 = vpop.xlane.xlu0 %234
      %v236 = vadd.f32 %v227, %v228
      %237 = vadd.xlane.f32.xlu0 %v236
      %v238 = vpop.xlane.xlu0 %237
      %v239 = vadd.f32 %v229, %v230
      %240 = vadd.xlane.f32.xlu0 %v239
      %v241 = vpop.xlane.xlu0 %240
      %v242 = vadd.f32 %v231, %v232
      %243 = vadd.xlane.f32.xlu0 %v242
      %v244 = vpop.xlane.xlu0 %243
      %v245 = vmul.f32 %v235, 0.00390625
      %v246 = vmul.f32 %v238, 0.00390625
      %v247 = vmul.f32 %v241, 0.00390625
      %v248 = vmul.f32 %v244, 0.00390625
      %v249 = vmax.f32 %v225, %v226
      %250 = vmax.xlane.f32.xlu0 %v249
      %v251 = vpop.xlane.xlu0 %250
      %v252 = vmax.f32 %v227, %v228
      %253 = vmax.xlane.f32.xlu0 %v252
      %v254 = vpop.xlane.xlu0 %253
      %v255 = vmax.f32 %v229, %v230
      %256 = vmax.xlane.f32.xlu0 %v255
      %v257 = vpop.xlane.xlu0 %256
      %v258 = vmax.f32 %v231, %v232
      %259 = vmax.xlane.f32.xlu0 %v258
      %v260 = vpop.xlane.xlu0 %259
      %vm261 = vcmask 7168
      %v262 = vsel %vm261, %v245, %v251
      %v263 = vsel %vm261, %v246, %v254
      %v264 = vsel %vm261, %v247, %v257
      %v265 = vsel %vm261, %v248, %v260
      %v266 = vld [vmem:[%s1] sm:$0x3]
      %v267 = vld [vmem:[%s2] sm:$0x3]
      %269 = vset.pattern.permute.xlu0 0
      %270 = vperm.xlu0 %269, %v267
      %v271 = vpop.permute.xlu0 %270
      %vm273 = vcmask 261120
      %v275 = vsel %vm273, %v266, 0
      %277 = vmatprep.subr.mxu0 0.0
      %278 = vmatpush1.msra.mxu0 %v262
      %279 = vmatprep.subr.mxu0 0.0
      %280 = vmatpush1.msra.mxu0 %v263
      %281 = vmatprep.subr.mxu0 0.0
      %282 = vmatpush1.msra.mxu0 %v264
      %283 = vmatprep.subr.mxu0 0.0
      %284 = vmatpush1.msra.mxu0 %v265
      %285 = vmatprep.subr.mxu0 0.0
      %286 = vmatpush1.msra.mxu0 0.0
      %287 = vmatprep.subr.mxu0 0.0
      %288 = vmatpush1.msra.mxu0 0.0
      %289 = vmatprep.subr.mxu0 0.0
      %290 = vmatpush1.msra.mxu0 0.0
      %291 = vmatprep.subr.mxu0 0.0
      %292 = vmatpush1.msra.mxu0 0.0
      %293 = vmatprep.subr.mxu0 0.0
      %294 = vmatpush1.msra.mxu0 0.0
      %295 = vmatprep.subr.mxu0 0.0
      %296 = vmatpush1.msra.mxu0 0.0
      %297 = vmatprep.subr.mxu0 0.0
      %298 = vmatpush1.msra.mxu0 0.0
      %299 = vmatprep.subr.mxu0 0.0
      %300 = vmatpush1.msra.mxu0 0.0
      %301 = vmatprep.subr.mxu0 0.0
      %302 = vmatpush1.msra.mxu0 0.0
      %303 = vmatprep.subr.mxu0 0.0
      %304 = vmatpush1.msra.mxu0 0.0
      %305 = vmatprep.subr.mxu0 0.0
      %306 = vmatpush1.msra.mxu0 0.0
      %307 = vmatprep.subr.mxu0 0.0
      %308 = vmatpush1.msra.mxu0 0.0
      %309 = vmatprep.subr.mxu0 0.0
      %310 = vmatpush1.msra.mxu0 0.0
      %311 = vmatprep.subr.mxu0 0.0
      %312 = vmatpush1.msra.mxu0 0.0
      %313 = vmatprep.subr.mxu0 0.0
      %314 = vmatpush1.msra.mxu0 0.0
      %315 = vmatprep.subr.mxu0 0.0
      %316 = vmatpush1.msra.mxu0 0.0
      %317 = vmatprep.subr.mxu0 0.0
      %318 = vmatpush1.msra.mxu0 0.0
      %319 = vmatprep.subr.mxu0 0.0
      %320 = vmatpush1.msra.mxu0 0.0
      %321 = vmatprep.subr.mxu0 0.0
      %322 = vmatpush1.msra.mxu0 0.0
      %323 = vmatprep.subr.mxu0 0.0
      %324 = vmatpush1.msra.mxu0 0.0
      %325 = vmatprep.subr.mxu0 0.0
      %326 = vmatpush1.msra.mxu0 0.0
      %327 = vmatprep.subr.mxu0 0.0
      %328 = vmatpush1.msra.mxu0 0.0
      %329 = vmatprep.subr.mxu0 0.0
      %330 = vmatpush1.msra.mxu0 0.0
      %331 = vmatprep.subr.mxu0 0.0
      %332 = vmatpush1.msra.mxu0 0.0
      %333 = vmatprep.subr.mxu0 0.0
      %334 = vmatpush1.msra.mxu0 0.0
      %335 = vmatprep.subr.mxu0 0.0
      %336 = vmatpush1.msra.mxu0 0.0
      %337 = vmatprep.subr.mxu0 0.0
      %338 = vmatpush1.msra.mxu0 0.0
      %339 = vmatprep.subr.mxu0 0.0
      %340 = vmatpush1.msra.mxu0 0.0
      %341 = vmatprep.mubr.f32.mxu0 0.0
      %342 = vmatmul.mubr.f32.gmra.mrb[0].mxu0 %v275
      %v343 = vpop.f32.mrb[0].mxu0
      %v344 = vadd.f32 %v271, %v343
      %v345 = vpop.f32.mrb[0].mxu0
      %346 = vdwg.mxu0
      %v347 = vmax.f32 %v344, 0.0
      %v348 = vld [vmem:[%s3] sm:$0xff]
      %v349 = vld [vmem:[%s3 + $0x8] sm:$0xff]
      %v350 = vld [vmem:[%s3 + $0x10] sm:$0xff]
      %v351 = vld [vmem:[%s3 + $0x18] sm:$0xff]
      %v352 = vld [vmem:[%s4] sm:$0xff]
      %v353 = vld [vmem:[%s4 + $0x8] sm:$0xff]
      %v354 = vld [vmem:[%s4 + $0x10] sm:$0xff]
      %v355 = vld [vmem:[%s4 + $0x18] sm:$0xff]
      %357 = vset.pattern.permute.xlu0 0
      %358 = vperm.xlu0 %357, %v352
      %v359 = vpop.permute.xlu0 %358
      %362 = vset.pattern.permute.xlu0 0
      %363 = vperm.xlu0 %362, %v353
      %v364 = vpop.permute.xlu0 %363
      %367 = vset.pattern.permute.xlu0 0
      %368 = vperm.xlu0 %367, %v354
      %v369 = vpop.permute.xlu0 %368
      %372 = vset.pattern.permute.xlu0 0
      %373 = vperm.xlu0 %372, %v355
      %v374 = vpop.permute.xlu0 %373
      %vm376 = vcmask 15360
      %v378 = vsel %vm376, %v348, 0
      %v381 = vsel %vm376, %v349, 0
      %v384 = vsel %vm376, %v350, 0
      %v387 = vsel %vm376, %v351, 0
      %vm389 = vcmask 1041408
      %v391 = vsel %vm389, %v347, 0
      %393 = vmatprep.subr.mxu0 0.0
      %394 = vmatpush1.msra.mxu0 %v391
      %395 = vmatprep.subr.mxu0 0.0
      %396 = vmatpush1.msra.mxu0 0.0
      %397 = vmatprep.subr.mxu0 0.0
      %398 = vmatpush1.msra.mxu0 0.0
      %399 = vmatprep.subr.mxu0 0.0
      %400 = vmatpush1.msra.mxu0 0.0
      %401 = vmatprep.subr.mxu0 0.0
      %402 = vmatpush1.msra.mxu0 0.0
      %403 = vmatprep.subr.mxu0 0.0
      %404 = vmatpush1.msra.mxu0 0.0
      %405 = vmatprep.subr.mxu0 0.0
      %406 = vmatpush1.msra.mxu0 0.0
      %407 = vmatprep.subr.mxu0 0.0
      %408 = vmatpush1.msra.mxu0 0.0
      %409 = vmatprep.subr.mxu0 0.0
      %410 = vmatpush1.msra.mxu0 0.0
      %411 = vmatprep.subr.mxu0 0.0
      %412 = vmatpush1.msra.mxu0 0.0
      %413 = vmatprep.subr.mxu0 0.0
      %414 = vmatpush1.msra.mxu0 0.0
      %415 = vmatprep.subr.mxu0 0.0
      %416 = vmatpush1.msra.mxu0 0.0
      %417 = vmatprep.subr.mxu0 0.0
      %418 = vmatpush1.msra.mxu0 0.0
      %419 = vmatprep.subr.mxu0 0.0
      %420 = vmatpush1.msra.mxu0 0.0
      %421 = vmatprep.subr.mxu0 0.0
      %422 = vmatpush1.msra.mxu0 0.0
      %423 = vmatprep.subr.mxu0 0.0
      %424 = vmatpush1.msra.mxu0 0.0
      %425 = vmatprep.subr.mxu0 0.0
      %426 = vmatpush1.msra.mxu0 0.0
      %427 = vmatprep.subr.mxu0 0.0
      %428 = vmatpush1.msra.mxu0 0.0
      %429 = vmatprep.subr.mxu0 0.0
      %430 = vmatpush1.msra.mxu0 0.0
      %431 = vmatprep.subr.mxu0 0.0
      %432 = vmatpush1.msra.mxu0 0.0
      %433 = vmatprep.subr.mxu0 0.0
      %434 = vmatpush1.msra.mxu0 0.0
      %435 = vmatprep.subr.mxu0 0.0
      %436 = vmatpush1.msra.mxu0 0.0
      %437 = vmatprep.subr.mxu0 0.0
      %438 = vmatpush1.msra.mxu0 0.0
      %439 = vmatprep.subr.mxu0 0.0
      %440 = vmatpush1.msra.mxu0 0.0
      %441 = vmatprep.subr.mxu0 0.0
      %442 = vmatpush1.msra.mxu0 0.0
      %443 = vmatprep.subr.mxu0 0.0
      %444 = vmatpush1.msra.mxu0 0.0
      %445 = vmatprep.subr.mxu0 0.0
      %446 = vmatpush1.msra.mxu0 0.0
      %447 = vmatprep.subr.mxu0 0.0
      %448 = vmatpush1.msra.mxu0 0.0
      %449 = vmatprep.subr.mxu0 0.0
      %450 = vmatpush1.msra.mxu0 0.0
      %451 = vmatprep.subr.mxu0 0.0
      %452 = vmatpush1.msra.mxu0 0.0
      %453 = vmatprep.subr.mxu0 0.0
      %454 = vmatpush1.msra.mxu0 0.0
      %455 = vmatprep.subr.mxu0 0.0
      %456 = vmatpush1.msra.mxu0 0.0
      %457 = vmatprep.mubr.f32.mxu0 0.0
      %458 = vmatmul.mubr.f32.gmra.mrb[0].mxu0 %v378
      %v459 = vpop.f32.mrb[0].mxu0
      %v460 = vadd.f32 %v359, %v459
      %v461 = vpop.f32.mrb[0].mxu0
      %462 = vmatprep.mubr.f32.mxu0 0.0
      %463 = vmatmul.mubr.f32.gmra.mrb[0].mxu0 %v381
      %v464 = vpop.f32.mrb[0].mxu0
      %v465 = vadd.f32 %v364, %v464
      %v466 = vpop.f32.mrb[0].mxu0
      %467 = vmatprep.mubr.f32.mxu0 0.0
      %468 = vmatmul.mubr.f32.gmra.mrb[0].mxu0 %v384
      %v469 = vpop.f32.mrb[0].mxu0
      %v470 = vadd.f32 %v369, %v469
      %v471 = vpop.f32.mrb[0].mxu0
      %472 = vmatprep.mubr.f32.mxu0 0.0
      %473 = vmatmul.mubr.f32.gmra.mrb[0].mxu0 %v387
      %v474 = vpop.f32.mrb[0].mxu0
      %v475 = vadd.f32 %v374, %v474
      %v476 = vpop.f32.mrb[0].mxu0
      %477 = vdwg.mxu0
      %482 = vrot.lane.b32.xlu0 %v460, 127
      %v483 = vpop.permute.xlu0 %482
      %484 = vrot.lane.b32.xlu0 %v465, 127
      %v485 = vpop.permute.xlu0 %484
      %486 = vrot.lane.b32.xlu0 %v470, 127
      %v487 = vpop.permute.xlu0 %486
      %488 = vrot.lane.b32.xlu0 %v475, 127
      %v489 = vpop.permute.xlu0 %488
      %v494 = vadd.f32 %v460, %v483
      %v495 = vadd.f32 %v465, %v485
      %v496 = vadd.f32 %v470, %v487
      %v497 = vadd.f32 %v475, %v489
      %v498 = vsub.f32 0.0, %v494
      %v499 = vsub.f32 0.0, %v495
      %v500 = vsub.f32 0.0, %v496
      %v501 = vsub.f32 0.0, %v497
      %v502 = vmul.f32 %v498, 1.442695
      %v503 = vpow.pop %v502
      %v504 = vmul.f32 %v499, 1.442695
      %v505 = vpow.pop %v504
      %v506 = vmul.f32 %v500, 1.442695
      %v507 = vpow.pop %v506
      %v508 = vmul.f32 %v501, 1.442695
      %v509 = vpow.pop %v508
      %v510 = vadd.f32 %v503, 1.0
      %v511 = vadd.f32 %v505, 1.0
      %v512 = vadd.f32 %v507, 1.0
      %v513 = vadd.f32 %v509, 1.0
      %v514 = vrcp.pop %v510
      %v515 = vmul.f32 1.0, %v514
      %v516 = vrcp.pop %v511
      %v517 = vmul.f32 1.0, %v516
      %v518 = vrcp.pop %v512
      %v519 = vmul.f32 1.0, %v518
      %v520 = vrcp.pop %v513
      %v521 = vmul.f32 1.0, %v520
      %523 = vset.pattern.permute.xlu0 0
      %524 = vperm.xlu0 %523, %v515
      %v525 = vpop.permute.xlu0 %524
      %528 = vset.pattern.permute.xlu0 0
      %529 = vperm.xlu0 %528, %v517
      %v530 = vpop.permute.xlu0 %529
      %533 = vset.pattern.permute.xlu0 0
      %534 = vperm.xlu0 %533, %v519
      %v535 = vpop.permute.xlu0 %534
      %538 = vset.pattern.permute.xlu0 0
      %539 = vperm.xlu0 %538, %v521
      %v540 = vpop.permute.xlu0 %539
      %v542 = vmul.f32 %v225, %v525
      %v543 = vmul.f32 %v226, %v525
      %v544 = vmul.f32 %v227, %v530
      %v545 = vmul.f32 %v228, %v530
      %v546 = vmul.f32 %v229, %v535
      %v547 = vmul.f32 %v230, %v535
      %v548 = vmul.f32 %v231, %v540
      %v549 = vmul.f32 %v232, %v540
      %550 = vst [vmem:[%s224] sm:$0xff] %v542
      %551 = vst [vmem:[%s224 + $0x8] sm:$0xff] %v543
      %552 = vst [vmem:[%s224 + $0x10] sm:$0xff] %v544
      %553 = vst [vmem:[%s224 + $0x18] sm:$0xff] %v545
      %554 = vst [vmem:[%s224 + $0x20] sm:$0xff] %v546
      %555 = vst [vmem:[%s224 + $0x28] sm:$0xff] %v547
      %556 = vst [vmem:[%s224 + $0x30] sm:$0xff] %v548
      %557 = vst [vmem:[%s224 + $0x38] sm:$0xff] %v549
      %p558 = scmp.lt.s32.totalorder %s16, 1
      %s559 = scalar_select %p558, %s16, 1
      %s560 = smul.addr %s559, 8
      %s561 = smul.addr %s560, 8
      %s562 = scalar_lea.vmem %s5, %s561
      // Predicated region
      $region41: #{_lambda_.1} parent=39 // pred_check
        %p563 = pneg %p144
      $region42: #{_lambda_.1} parent=39 // pred_check_branch
        %565 = sbr.rel (%p563) target = $region44
      $region43: #{_lambda_.1} parent=39 // pred_region
        _
      $region44: #{_lambda_.1} parent=39 // pred_fallthru
        _
    $region40: #{_lambda_.1} parent=5 // pred_fallthru
      _
    %p566 = scmp.le.s32.totalorder 2, %s11
    // Predicated region
    $region45: #{_lambda_.1} parent=5 // pred_check
      %p567 = pneg %p566
    $region46: #{_lambda_.1} parent=5 // pred_check_branch
      %569 = sbr.rel (%p567) target = $region48
    $region47: #{_lambda_.1} parent=5 // pred_region
      %s570 = ssub.s32 %s11, 2
      // Predicated region
      $region49: #{_lambda_.1} parent=47 // pred_check
        %p571 = pneg %p150
      $region50: #{_lambda_.1} parent=47 // pred_check_branch
        %573 = sbr.rel (%p571) target = $region52
      $region51: #{_lambda_.1} parent=47 // pred_region
        %p574 = scmp.lt.s32.totalorder %s17, 1
        %s575 = scalar_select %p574, %s17, 1
        %s576 = smul.addr %s575, 8
        %s577 = smul.addr %s576, 8
        %s578 = scalar_lea.vmem %s5, %s577
      $region52: #{_lambda_.1} parent=47 // pred_fallthru
        _
    $region48: #{_lambda_.1} parent=5 // pred_fallthru
      _
  $region6: #{_lambda_.1} parent=0 // loop_footer
    %s15 = sadd.s32 1, %s11
  $region7: #{_lambda_.1} parent=0 // loop_footer_branch
    %10 = sbr.rel target = $region3
  $region8: #{_lambda_.1} parent=0 // loop_exit
    _

</llo_original>
